<compile_context>
chip_gen: v5e
topology: v5e:2x2
jax: 0.10.0
libtpu: 0.0.40
codegen_flags: <defaults>
</compile_context>

<pallas_src>
import functools

import jax
import jax.numpy as jnp
from jax import lax
from jax.experimental import pallas as pl
from jax.experimental.pallas import tpu as pltpu


def _embedding_kernel(ids_ref,    # VMEM: (T, 3) int32, pre-offset row indices
                      table_ref,  # VMEM: (VROWS, DT) combined block-diag table
                      out_ref,    # VMEM: (T, DT) output tile
                      *, vrows):
    T = out_ref.shape[0]

    # One-hot over the combined table rows.  Each token contributes exactly
    # three ones (word row, V+pos1 row, V+2L+pos2 row); the three column
    # blocks of the table are disjoint, so a single matmul yields the
    # concatenated [word | pos1 | pos2] embedding directly.
    iota = lax.broadcasted_iota(jnp.int32, (T, vrows), 1)
    onehot = ((iota == ids_ref[:, 0:1]) |
              (iota == ids_ref[:, 1:2]) |
              (iota == ids_ref[:, 2:3])).astype(table_ref.dtype)

    out_ref[...] = jnp.dot(onehot, table_ref[...],
                           preferred_element_type=jnp.float32
                           ).astype(out_ref.dtype)


def build_embedding_tables(word_table, pos1_table, pos2_table):
    """Build the block-diagonal combined table ONCE (module-init time).

    Layout of rows / columns:
      rows [0, V)          -> word embedding  in cols [0, WD)
      rows [V, V+2L)       -> pos1 embedding  in cols [WD, WD+PD)
      rows [V+2L, V+4L)    -> pos2 embedding  in cols [WD+PD, WD+2PD)
    """
    V, WD = word_table.shape
    TWO_L, PD = pos1_table.shape
    DT = WD + 2 * PD
    VROWS = V + 2 * TWO_L
    comb = jnp.zeros((VROWS, DT), jnp.float32)
    comb = comb.at[:V, :WD].set(word_table.astype(jnp.float32))
    comb = comb.at[V:V + TWO_L, WD:WD + PD].set(pos1_table.astype(jnp.float32))
    comb = comb.at[V + TWO_L:, WD + PD:].set(pos2_table.astype(jnp.float32))
    return comb, V, TWO_L


def embedding_forward(word, pos1, pos2, comb_table, vocab_size, two_l,
                      *, tokens_per_tile=128):
    """word/pos1/pos2: [B, L] int32.  Returns [B, L, word_dim + 2*pos_dim] f32."""
    B, L = word.shape
    VROWS, DT = comb_table.shape

    T = tokens_per_tile
    N = B * L
    n_tiles = pl.cdiv(N, T)
    N_pad = n_tiles * T

    # Pre-offset indices into combined-table row space: one (N, 3) array.
    ids = jnp.stack(
        [word.reshape(N).astype(jnp.int32),
         pos1.reshape(N).astype(jnp.int32) + vocab_size,
         pos2.reshape(N).astype(jnp.int32) + vocab_size + two_l],
        axis=1)
    if N_pad != N:  # pad token count to a tile multiple (rows sliced off below)
        ids = jnp.pad(ids, ((0, N_pad - N), (0, 0)))

    kernel = functools.partial(_embedding_kernel, vrows=VROWS)

    out2d = pl.pallas_call(
        kernel,
        out_shape=jax.ShapeDtypeStruct((N_pad, DT), jnp.float32),
        grid=(n_tiles,),
        in_specs=[
            pl.BlockSpec((T, 3), lambda i: (i, 0)),          # token-tile of ids
            pl.BlockSpec((VROWS, DT), lambda i: (0, 0)),     # resident table
        ],
        out_specs=pl.BlockSpec((T, DT), lambda i: (i, 0)),   # one full-tile store
        compiler_params=pltpu.CompilerParams(
            dimension_semantics=("parallel",)),
    )(ids, comb_table)

    # Free layout plumbing in the wrapper (kernel output stays a flat 2-D slab).
    return out2d[:N].reshape(B, L, DT)


if __name__ == "__main__":
    # Small config consistent with the module's __init__.
    max_length = 16          # confs['max_length']
    word_dim = 50            # confs['word_embedding_dim'] (WordVecMat dim=50)
    pos_dim = 5              # confs['pos_embedding_dim']
    vocab = 40               # len(word2id); last index is <PADDING>

    key = jax.random.PRNGKey(0)
    k_w, k_p1, k_p2, k_iw, k_i1, k_i2 = jax.random.split(key, 6)

    # Deterministic parameter init (mimics WordVecMat: unit-norm rows,
    # padding row = 0; nn.Embedding padding_idx rows zeroed).
    word_table = jax.random.uniform(k_w, (vocab, word_dim),
                                    minval=-0.1, maxval=0.1, dtype=jnp.float32)
    word_table = word_table / jnp.sqrt(
        jnp.sum(word_table * word_table, axis=1, keepdims=True))
    word_table = word_table.at[vocab - 1].set(0.0)       # padding_idx = vocab-1

    pos1_table = jax.random.normal(k_p1, (2 * max_length, pos_dim),
                                   dtype=jnp.float32).at[0].set(0.0)
    pos2_table = jax.random.normal(k_p2, (2 * max_length, pos_dim),
                                   dtype=jnp.float32).at[0].set(0.0)

    # Built once at "module init" (hoisted out of the forward call).
    comb_table, V, TWO_L = build_embedding_tables(word_table, pos1_table,
                                                  pos2_table)
    comb_table = jax.block_until_ready(comb_table)

    # Example inputs: word / pos1 / pos2 index tensors of shape [B, L].
    B, L = 2, max_length
    word = jax.random.randint(k_iw, (B, L), 0, vocab, dtype=jnp.int32)
    pos1 = jax.random.randint(k_i1, (B, L), 0, 2 * max_length, dtype=jnp.int32)
    pos2 = jax.random.randint(k_i2, (B, L), 0, 2 * max_length, dtype=jnp.int32)

    out = embedding_forward(word, pos1, pos2, comb_table, V, TWO_L)
    out = jax.block_until_ready(out)

    # Reference check (plain JAX gather + concat).
    ref = jnp.concatenate([word_table[word], pos1_table[pos1], pos2_table[pos2]],
                          axis=2)
    assert out.shape == (B, L, word_dim + 2 * pos_dim)
    assert jnp.allclose(out, ref, atol=1e-5), "mismatch vs reference"

    print("KERNEL_OK")
</pallas_src>

<mosaic_0001>
module attributes {stable_mosaic.version = 11 : i64} {
  func.func @_embedding_kernel(%arg0: i32, %arg1: memref<128x3xi32, #tpu.memory_space<vmem>>, %arg2: memref<104x60xf32, #tpu.memory_space<vmem>>, %arg3: memref<128x60xf32, #tpu.memory_space<vmem>>) attributes {dimension_semantics = [#tpu.dimension_semantics<parallel>], iteration_bounds = array<i64: 1>, scalar_prefetch = 0 : i64, scratch_operands = 0 : i64, tpu.core_type = #tpu.core_type<tc>, window_params = [{transform_indices = @transform_0, window_bounds = array<i64: 128, 3>}, {pipeline_mode = #tpu.pipeline_mode<synchronous>, transform_indices = @transform_1, window_bounds = array<i64: 104, 60>}, {transform_indices = @transform_2, window_bounds = array<i64: 128, 60>}]} {
    %0 = tpu.iota {dimensions = array<i32: 1>} : vector<128x104xi32>
    %c0 = arith.constant 0 : index
    %c0_0 = arith.constant 0 : index
    %1 = vector.load %arg1[%c0, %c0_0] : memref<128x3xi32, #tpu.memory_space<vmem>>, vector<128x1xi32>
    %2 = vector.broadcast %1 : vector<128x1xi32> to vector<128x104xi32>
    %3 = arith.cmpi eq, %0, %2 : vector<128x104xi32>
    %c0_1 = arith.constant 0 : index
    %c1 = arith.constant 1 : index
    %4 = vector.load %arg1[%c0_1, %c1] : memref<128x3xi32, #tpu.memory_space<vmem>>, vector<128x1xi32>
    %5 = vector.broadcast %4 : vector<128x1xi32> to vector<128x104xi32>
    %6 = arith.cmpi eq, %0, %5 : vector<128x104xi32>
    %7 = arith.ori %3, %6 : vector<128x104xi1>
    %c0_2 = arith.constant 0 : index
    %c2 = arith.constant 2 : index
    %8 = vector.load %arg1[%c0_2, %c2] : memref<128x3xi32, #tpu.memory_space<vmem>>, vector<128x1xi32>
    %9 = vector.broadcast %8 : vector<128x1xi32> to vector<128x104xi32>
    %10 = arith.cmpi eq, %0, %9 : vector<128x104xi32>
    %11 = arith.ori %7, %10 : vector<128x104xi1>
    %12 = arith.extui %11 : vector<128x104xi1> to vector<128x104xi32>
    %13 = arith.sitofp %12 : vector<128x104xi32> to vector<128x104xf32>
    %c0_3 = arith.constant 0 : index
    %c0_4 = arith.constant 0 : index
    %14 = vector.load %arg2[%c0_3, %c0_4] : memref<104x60xf32, #tpu.memory_space<vmem>>, vector<104x60xf32>
    %cst = arith.constant dense<0.000000e+00> : vector<128x60xf32>
    %15 = tpu.matmul %13, %14, %cst {dimension_numbers = #tpu.dot_dimension_numbers<[1], [0], [0], [1], [0, 0, 1, 1], [], []>} : vector<128x104xf32>, vector<104x60xf32>, vector<128x60xf32> -> vector<128x60xf32>
    %c0_5 = arith.constant 0 : index
    %c0_6 = arith.constant 0 : index
    %16 = vector.load %arg3[%c0_5, %c0_6] : memref<128x60xf32, #tpu.memory_space<vmem>>, vector<128x60xf32>
    tpu.vector_store %arg3[%c0_5, %c0_6], %15 {strides = array<i32>} : memref<128x60xf32, #tpu.memory_space<vmem>>, vector<128x60xf32>,
    return
  }
  func.func @transform_0(%arg0: i32) -> (i32, i32) {
    %c0_i32 = arith.constant 0 : i32
    %c0_i32_0 = arith.constant 0 : i32
    return %arg0, %c0_i32 : i32, i32
  }
  func.func @transform_1(%arg0: i32) -> (i32, i32) {
    %c0_i32 = arith.constant 0 : i32
    %c0_i32_0 = arith.constant 0 : i32
    %c0_i32_1 = arith.constant 0 : i32
    return %c0_i32, %c0_i32_0 : i32, i32
  }
  func.func @transform_2(%arg0: i32) -> (i32, i32) {
    %c0_i32 = arith.constant 0 : i32
    %c0_i32_0 = arith.constant 0 : i32
    return %arg0, %c0_i32 : i32, i32
  }
}

</mosaic_0001>

<llo_original>
// kernel: tpu_custom_call.1
$region0: #{tpu_custom_call.1}
  #allocation0 [shape = 'u32[]', space=smem, size = 0x4, offset = 0x4, fixed_abs, tag = 'smem constant byte address 0x4 - core index']
  #allocation1 [shape = 'u32[72,128]{1,0:T(1,128)}', space=vmem, size = 0x9000, scoped, tag = 'internal scratch']
  %s0 = inlined_call_operand.vmem [shape: s32[128,3], index: 0, kind: input, shape index: {}]
  %s1 = inlined_call_operand.vmem [shape: f32[104,60], index: 1, kind: input, shape index: {}]
  %s2 = inlined_call_operand.vmem [shape: f32[128,60], index: 2, kind: output, shape index: {}]
  %s3 = sld [smem:[#allocation0]]
  $region18: #{tpu_custom_call.1} parent=0
    _
  %s5 = ssub.s32 1, %s3
  %s6 = scalar_select 0, %s5, %s3
  // Predicated region
  $region2: #{tpu_custom_call.1} parent=0 // pred_check
    _
  $region3: #{tpu_custom_call.1} parent=0 // pred_check_branch
    %8 = sbr.rel (0) target = $region5
  $region4: #{tpu_custom_call.1} parent=0 // pred_region
    _
  $region5: #{tpu_custom_call.1} parent=0 // pred_fallthru
    _
  // Predicated region
  $region6: #{tpu_custom_call.1} parent=0 // pred_check
    _
  $region7: #{tpu_custom_call.1} parent=0 // pred_check_branch
    %10 = sbr.rel (0) target = $region9
  $region8: #{tpu_custom_call.1} parent=0 // pred_region
    _
  $region9: #{tpu_custom_call.1} parent=0 // pred_fallthru
    _
  %v11 = vlaneseq
  %v12 = vand.u32 %v11, 127
  %v13 = vld [vmem:[%s0] sm:$0xff]
  %v14 = vld [vmem:[%s0 + $0x8] sm:$0xff]
  %v15 = vld [vmem:[%s0 + $0x10] sm:$0xff]
  %v16 = vld [vmem:[%s0 + $0x18] sm:$0xff]
  %v17 = vld [vmem:[%s0 + $0x20] sm:$0xff]
  %v18 = vld [vmem:[%s0 + $0x28] sm:$0xff]
  %v19 = vld [vmem:[%s0 + $0x30] sm:$0xff]
  %v20 = vld [vmem:[%s0 + $0x38] sm:$0xff]
  %v21 = vld [vmem:[%s0 + $0x40] sm:$0xff]
  %v22 = vld [vmem:[%s0 + $0x48] sm:$0xff]
  %v23 = vld [vmem:[%s0 + $0x50] sm:$0xff]
  %v24 = vld [vmem:[%s0 + $0x58] sm:$0xff]
  %v25 = vld [vmem:[%s0 + $0x60] sm:$0xff]
  %v26 = vld [vmem:[%s0 + $0x68] sm:$0xff]
  %v27 = vld [vmem:[%s0 + $0x70] sm:$0xff]
  %v28 = vld [vmem:[%s0 + $0x78] sm:$0xff]
  %29 = vset.pattern.permute.xlu0 0
  %30 = vperm.xlu0 %29, %v13
  %v31 = vpop.permute.xlu0 %30
  %32 = vset.pattern.permute.xlu0 0
  %33 = vperm.xlu0 %32, %v14
  %v34 = vpop.permute.xlu0 %33
  %35 = vset.pattern.permute.xlu0 0
  %36 = vperm.xlu0 %35, %v15
  %v37 = vpop.permute.xlu0 %36
  %38 = vset.pattern.permute.xlu0 0
  %39 = vperm.xlu0 %38, %v16
  %v40 = vpop.permute.xlu0 %39
  %41 = vset.pattern.permute.xlu0 0
  %42 = vperm.xlu0 %41, %v17
  %v43 = vpop.permute.xlu0 %42
  %44 = vset.pattern.permute.xlu0 0
  %45 = vperm.xlu0 %44, %v18
  %v46 = vpop.permute.xlu0 %45
  %47 = vset.pattern.permute.xlu0 0
  %48 = vperm.xlu0 %47, %v19
  %v49 = vpop.permute.xlu0 %48
  %50 = vset.pattern.permute.xlu0 0
  %51 = vperm.xlu0 %50, %v20
  %v52 = vpop.permute.xlu0 %51
  %53 = vset.pattern.permute.xlu0 0
  %54 = vperm.xlu0 %53, %v21
  %v55 = vpop.permute.xlu0 %54
  %56 = vset.pattern.permute.xlu0 0
  %57 = vperm.xlu0 %56, %v22
  %v58 = vpop.permute.xlu0 %57
  %59 = vset.pattern.permute.xlu0 0
  %60 = vperm.xlu0 %59, %v23
  %v61 = vpop.permute.xlu0 %60
  %62 = vset.pattern.permute.xlu0 0
  %63 = vperm.xlu0 %62, %v24
  %v64 = vpop.permute.xlu0 %63
  %65 = vset.pattern.permute.xlu0 0
  %66 = vperm.xlu0 %65, %v25
  %v67 = vpop.permute.xlu0 %66
  %68 = vset.pattern.permute.xlu0 0
  %69 = vperm.xlu0 %68, %v26
  %v70 = vpop.permute.xlu0 %69
  %71 = vset.pattern.permute.xlu0 0
  %72 = vperm.xlu0 %71, %v27
  %v73 = vpop.permute.xlu0 %72
  %74 = vset.pattern.permute.xlu0 0
  %75 = vperm.xlu0 %74, %v28
  %v76 = vpop.permute.xlu0 %75
  %vm77 = vcmp.eq.s32.totalorder %v12, %v31
  %vm78 = vcmp.eq.s32.totalorder %v12, %v34
  %vm79 = vcmp.eq.s32.totalorder %v12, %v37
  %vm80 = vcmp.eq.s32.totalorder %v12, %v40
  %vm81 = vcmp.eq.s32.totalorder %v12, %v43
  %vm82 = vcmp.eq.s32.totalorder %v12, %v46
  %vm83 = vcmp.eq.s32.totalorder %v12, %v49
  %vm84 = vcmp.eq.s32.totalorder %v12, %v52
  %vm85 = vcmp.eq.s32.totalorder %v12, %v55
  %vm86 = vcmp.eq.s32.totalorder %v12, %v58
  %vm87 = vcmp.eq.s32.totalorder %v12, %v61
  %vm88 = vcmp.eq.s32.totalorder %v12, %v64
  %vm89 = vcmp.eq.s32.totalorder %v12, %v67
  %vm90 = vcmp.eq.s32.totalorder %v12, %v70
  %vm91 = vcmp.eq.s32.totalorder %v12, %v73
  %vm92 = vcmp.eq.s32.totalorder %v12, %v76
  %93 = vset.pattern.permute.xlu0 1
  %94 = vperm.xlu0 %93, %v13
  %v95 = vpop.permute.xlu0 %94
  %96 = vset.pattern.permute.xlu0 1
  %97 = vperm.xlu0 %96, %v14
  %v98 = vpop.permute.xlu0 %97
  %99 = vset.pattern.permute.xlu0 1
  %100 = vperm.xlu0 %99, %v15
  %v101 = vpop.permute.xlu0 %100
  %102 = vset.pattern.permute.xlu0 1
  %103 = vperm.xlu0 %102, %v16
  %v104 = vpop.permute.xlu0 %103
  %105 = vset.pattern.permute.xlu0 1
  %106 = vperm.xlu0 %105, %v17
  %v107 = vpop.permute.xlu0 %106
  %108 = vset.pattern.permute.xlu0 1
  %109 = vperm.xlu0 %108, %v18
  %v110 = vpop.permute.xlu0 %109
  %111 = vset.pattern.permute.xlu0 1
  %112 = vperm.xlu0 %111, %v19
  %v113 = vpop.permute.xlu0 %112
  %114 = vset.pattern.permute.xlu0 1
  %115 = vperm.xlu0 %114, %v20
  %v116 = vpop.permute.xlu0 %115
  %117 = vset.pattern.permute.xlu0 1
  %118 = vperm.xlu0 %117, %v21
  %v119 = vpop.permute.xlu0 %118
  %120 = vset.pattern.permute.xlu0 1
  %121 = vperm.xlu0 %120, %v22
  %v122 = vpop.permute.xlu0 %121
  %123 = vset.pattern.permute.xlu0 1
  %124 = vperm.xlu0 %123, %v23
  %v125 = vpop.permute.xlu0 %124
  %126 = vset.pattern.permute.xlu0 1
  %127 = vperm.xlu0 %126, %v24
  %v128 = vpop.permute.xlu0 %127
  %129 = vset.pattern.permute.xlu0 1
  %130 = vperm.xlu0 %129, %v25
  %v131 = vpop.permute.xlu0 %130
  %132 = vset.pattern.permute.xlu0 1
  %133 = vperm.xlu0 %132, %v26
  %v134 = vpop.permute.xlu0 %133
  %135 = vset.pattern.permute.xlu0 1
  %136 = vperm.xlu0 %135, %v27
  %v137 = vpop.permute.xlu0 %136
  %138 = vset.pattern.permute.xlu0 1
  %139 = vperm.xlu0 %138, %v28
  %v140 = vpop.permute.xlu0 %139
  %vm141 = vcmp.eq.s32.totalorder %v12, %v95
  %vm142 = vcmp.eq.s32.totalorder %v12, %v98
  %vm143 = vcmp.eq.s32.totalorder %v12, %v101
  %vm144 = vcmp.eq.s32.totalorder %v12, %v104
  %vm145 = vcmp.eq.s32.totalorder %v12, %v107
  %vm146 = vcmp.eq.s32.totalorder %v12, %v110
  %vm147 = vcmp.eq.s32.totalorder %v12, %v113
  %vm148 = vcmp.eq.s32.totalorder %v12, %v116
  %vm149 = vcmp.eq.s32.totalorder %v12, %v119
  %vm150 = vcmp.eq.s32.totalorder %v12, %v122
  %vm151 = vcmp.eq.s32.totalorder %v12, %v125
  %vm152 = vcmp.eq.s32.totalorder %v12, %v128
  %vm153 = vcmp.eq.s32.totalorder %v12, %v131
  %vm154 = vcmp.eq.s32.totalorder %v12, %v134
  %vm155 = vcmp.eq.s32.totalorder %v12, %v137
  %vm156 = vcmp.eq.s32.totalorder %v12, %v140
  %vm157 = vmor %vm77, %vm141
  %vm158 = vmor %vm78, %vm142
  %vm159 = vmor %vm79, %vm143
  %vm160 = vmor %vm80, %vm144
  %vm161 = vmor %vm81, %vm145
  %vm162 = vmor %vm82, %vm146
  %vm163 = vmor %vm83, %vm147
  %vm164 = vmor %vm84, %vm148
  %vm165 = vmor %vm85, %vm149
  %vm166 = vmor %vm86, %vm150
  %vm167 = vmor %vm87, %vm151
  %vm168 = vmor %vm88, %vm152
  %vm169 = vmor %vm89, %vm153
  %vm170 = vmor %vm90, %vm154
  %vm171 = vmor %vm91, %vm155
  %vm172 = vmor %vm92, %vm156
  %173 = vset.pattern.permute.xlu0 2
  %174 = vperm.xlu0 %173, %v13
  %v175 = vpop.permute.xlu0 %174
  %176 = vset.pattern.permute.xlu0 2
  %177 = vperm.xlu0 %176, %v14
  %v178 = vpop.permute.xlu0 %177
  %179 = vset.pattern.permute.xlu0 2
  %180 = vperm.xlu0 %179, %v15
  %v181 = vpop.permute.xlu0 %180
  %182 = vset.pattern.permute.xlu0 2
  %183 = vperm.xlu0 %182, %v16
  %v184 = vpop.permute.xlu0 %183
  %185 = vset.pattern.permute.xlu0 2
  %186 = vperm.xlu0 %185, %v17
  %v187 = vpop.permute.xlu0 %186
  %188 = vset.pattern.permute.xlu0 2
  %189 = vperm.xlu0 %188, %v18
  %v190 = vpop.permute.xlu0 %189
  %191 = vset.pattern.permute.xlu0 2
  %192 = vperm.xlu0 %191, %v19
  %v193 = vpop.permute.xlu0 %192
  %194 = vset.pattern.permute.xlu0 2
  %195 = vperm.xlu0 %194, %v20
  %v196 = vpop.permute.xlu0 %195
  %197 = vset.pattern.permute.xlu0 2
  %198 = vperm.xlu0 %197, %v21
  %v199 = vpop.permute.xlu0 %198
  %200 = vset.pattern.permute.xlu0 2
  %201 = vperm.xlu0 %200, %v22
  %v202 = vpop.permute.xlu0 %201
  %203 = vset.pattern.permute.xlu0 2
  %204 = vperm.xlu0 %203, %v23
  %v205 = vpop.permute.xlu0 %204
  %206 = vset.pattern.permute.xlu0 2
  %207 = vperm.xlu0 %206, %v24
  %v208 = vpop.permute.xlu0 %207
  %209 = vset.pattern.permute.xlu0 2
  %210 = vperm.xlu0 %209, %v25
  %v211 = vpop.permute.xlu0 %210
  %212 = vset.pattern.permute.xlu0 2
  %213 = vperm.xlu0 %212, %v26
  %v214 = vpop.permute.xlu0 %213
  %215 = vset.pattern.permute.xlu0 2
  %216 = vperm.xlu0 %215, %v27
  %v217 = vpop.permute.xlu0 %216
  %218 = vset.pattern.permute.xlu0 2
  %219 = vperm.xlu0 %218, %v28
  %v220 = vpop.permute.xlu0 %219
  %vm221 = vcmp.eq.s32.totalorder %v12, %v175
  %vm222 = vcmp.eq.s32.totalorder %v12, %v178
  %vm223 = vcmp.eq.s32.totalorder %v12, %v181
  %vm224 = vcmp.eq.s32.totalorder %v12, %v184
  %vm225 = vcmp.eq.s32.totalorder %v12, %v187
  %vm226 = vcmp.eq.s32.totalorder %v12, %v190
  %vm227 = vcmp.eq.s32.totalorder %v12, %v193
  %vm228 = vcmp.eq.s32.totalorder %v12, %v196
  %vm229 = vcmp.eq.s32.totalorder %v12, %v199
  %vm230 = vcmp.eq.s32.totalorder %v12, %v202
  %vm231 = vcmp.eq.s32.totalorder %v12, %v205
  %vm232 = vcmp.eq.s32.totalorder %v12, %v208
  %vm233 = vcmp.eq.s32.totalorder %v12, %v211
  %vm234 = vcmp.eq.s32.totalorder %v12, %v214
  %vm235 = vcmp.eq.s32.totalorder %v12, %v217
  %vm236 = vcmp.eq.s32.totalorder %v12, %v220
  %vm237 = vmor %vm157, %vm221
  %vm238 = vmor %vm158, %vm222
  %vm239 = vmor %vm159, %vm223
  %vm240 = vmor %vm160, %vm224
  %vm241 = vmor %vm161, %vm225
  %vm242 = vmor %vm162, %vm226
  %vm243 = vmor %vm163, %vm227
  %vm244 = vmor %vm164, %vm228
  %vm245 = vmor %vm165, %vm229
  %vm246 = vmor %vm166, %vm230
  %vm247 = vmor %vm167, %vm231
  %vm248 = vmor %vm168, %vm232
  %vm249 = vmor %vm169, %vm233
  %vm250 = vmor %vm170, %vm234
  %vm251 = vmor %vm171, %vm235
  %vm252 = vmor %vm172, %vm236
  %v253 = vsel %vm237, 1, 0
  %v254 = vsel %vm238, 1, 0
  %v255 = vsel %vm239, 1, 0
  %v256 = vsel %vm240, 1, 0
  %v257 = vsel %vm241, 1, 0
  %v258 = vsel %vm242, 1, 0
  %v259 = vsel %vm243, 1, 0
  %v260 = vsel %vm244, 1, 0
  %v261 = vsel %vm245, 1, 0
  %v262 = vsel %vm246, 1, 0
  %v263 = vsel %vm247, 1, 0
  %v264 = vsel %vm248, 1, 0
  %v265 = vsel %vm249, 1, 0
  %v266 = vsel %vm250, 1, 0
  %v267 = vsel %vm251, 1, 0
  %v268 = vsel %vm252, 1, 0
  %v269 = vcvt.s32.f32 %v253
  %v270 = vcvt.s32.f32 %v254
  %v271 = vcvt.s32.f32 %v255
  %v272 = vcvt.s32.f32 %v256
  %v273 = vcvt.s32.f32 %v257
  %v274 = vcvt.s32.f32 %v258
  %v275 = vcvt.s32.f32 %v259
  %v276 = vcvt.s32.f32 %v260
  %v277 = vcvt.s32.f32 %v261
  %v278 = vcvt.s32.f32 %v262
  %v279 = vcvt.s32.f32 %v263
  %v280 = vcvt.s32.f32 %v264
  %v281 = vcvt.s32.f32 %v265
  %v282 = vcvt.s32.f32 %v266
  %v283 = vcvt.s32.f32 %v267
  %v284 = vcvt.s32.f32 %v268
  %v285 = vld [vmem:[%s1] sm:$0xff]
  %v286 = vld [vmem:[%s1 + $0x8] sm:$0xff]
  %v287 = vld [vmem:[%s1 + $0x10] sm:$0xff]
  %v288 = vld [vmem:[%s1 + $0x18] sm:$0xff]
  %v289 = vld [vmem:[%s1 + $0x20] sm:$0xff]
  %v290 = vld [vmem:[%s1 + $0x28] sm:$0xff]
  %v291 = vld [vmem:[%s1 + $0x30] sm:$0xff]
  %v292 = vld [vmem:[%s1 + $0x38] sm:$0xff]
  %v293 = vld [vmem:[%s1 + $0x40] sm:$0xff]
  %v294 = vld [vmem:[%s1 + $0x48] sm:$0xff]
  %v295 = vld [vmem:[%s1 + $0x50] sm:$0xff]
  %v296 = vld [vmem:[%s1 + $0x58] sm:$0xff]
  %v297 = vld [vmem:[%s1 + $0x60] sm:$0xff]
  %vm298 = vcmask 850944
  %v300 = vsel %vm298, %v269, 0
  %v303 = vsel %vm298, %v270, 0
  %v306 = vsel %vm298, %v271, 0
  %v309 = vsel %vm298, %v272, 0
  %v312 = vsel %vm298, %v273, 0
  %v315 = vsel %vm298, %v274, 0
  %v318 = vsel %vm298, %v275, 0
  %v321 = vsel %vm298, %v276, 0
  %v324 = vsel %vm298, %v277, 0
  %v327 = vsel %vm298, %v278, 0
  %v330 = vsel %vm298, %v279, 0
  %v333 = vsel %vm298, %v280, 0
  %v336 = vsel %vm298, %v281, 0
  %v339 = vsel %vm298, %v282, 0
  %v342 = vsel %vm298, %v283, 0
  %v345 = vsel %vm298, %v284, 0
  %347 = vmatpush.msra.mxu0 0.0
  %348 = vmatpush.msra.mxu0 0.0
  %349 = vmatpush.msra.mxu0 0.0
  %350 = vmatpush.msra.mxu0 %v297
  %351 = vmatpush.msra.mxu0 %v296
  %352 = vmatpush.msra.mxu0 %v295
  %353 = vmatpush.msra.mxu0 %v294
  %354 = vmatpush.msra.mxu0 %v293
  %355 = vmatpush.msra.mxu0 %v292
  %356 = vmatpush.msra.mxu0 %v291
  %357 = vmatpush.msra.mxu0 %v290
  %358 = vmatpush.msra.mxu0 %v289
  %359 = vmatpush.msra.mxu0 %v288
  %360 = vmatpush.msra.mxu0 %v287
  %361 = vmatpush.msra.mxu0 %v286
  %362 = vmatpush.msra.mxu0 %v285
  %363 = vmatmul.f32.gmra.mxu0 %v300
  %v364 = vpop.f32.mrf.mxu0
  %v365 = vadd.f32 0.0, %v364
  %366 = vmatmul.f32.gmra.mxu0 %v303
  %v367 = vpop.f32.mrf.mxu0
  %v368 = vadd.f32 0.0, %v367
  %369 = vmatmul.f32.gmra.mxu0 %v306
  %v370 = vpop.f32.mrf.mxu0
  %v371 = vadd.f32 0.0, %v370
  %372 = vmatmul.f32.gmra.mxu0 %v309
  %v373 = vpop.f32.mrf.mxu0
  %v374 = vadd.f32 0.0, %v373
  %375 = vmatmul.f32.gmra.mxu0 %v312
  %v376 = vpop.f32.mrf.mxu0
  %v377 = vadd.f32 0.0, %v376
  %378 = vmatmul.f32.gmra.mxu0 %v315
  %v379 = vpop.f32.mrf.mxu0
  %v380 = vadd.f32 0.0, %v379
  %381 = vmatmul.f32.gmra.mxu0 %v318
  %v382 = vpop.f32.mrf.mxu0
  %v383 = vadd.f32 0.0, %v382
  %384 = vmatmul.f32.gmra.mxu0 %v321
  %v385 = vpop.f32.mrf.mxu0
  %v386 = vadd.f32 0.0, %v385
  %387 = vmatmul.f32.gmra.mxu0 %v324
  %v388 = vpop.f32.mrf.mxu0
  %v389 = vadd.f32 0.0, %v388
  %390 = vmatmul.f32.gmra.mxu0 %v327
  %v391 = vpop.f32.mrf.mxu0
  %v392 = vadd.f32 0.0, %v391
  %393 = vmatmul.f32.gmra.mxu0 %v330
  %v394 = vpop.f32.mrf.mxu0
  %v395 = vadd.f32 0.0, %v394
  %396 = vmatmul.f32.gmra.mxu0 %v333
  %v397 = vpop.f32.mrf.mxu0
  %v398 = vadd.f32 0.0, %v397
  %399 = vmatmul.f32.gmra.mxu0 %v336
  %v400 = vpop.f32.mrf.mxu0
  %v401 = vadd.f32 0.0, %v400
  %402 = vmatmul.f32.gmra.mxu0 %v339
  %v403 = vpop.f32.mrf.mxu0
  %v404 = vadd.f32 0.0, %v403
  %405 = vmatmul.f32.gmra.mxu0 %v342
  %v406 = vpop.f32.mrf.mxu0
  %v407 = vadd.f32 0.0, %v406
  %408 = vmatmul.f32.gmra.mxu0 %v345
  %v409 = vpop.f32.mrf.mxu0
  %v410 = vadd.f32 0.0, %v409
  %411 = vdwg.mxu0
  %vm412 = vcmask 490496
  %413 = vst.msk [vmem:[%s2] sm:$0xff] %vm412, %v365
  %414 = vst.msk [vmem:[%s2 + $0x8] sm:$0xff] %vm412, %v368
  %415 = vst.msk [vmem:[%s2 + $0x10] sm:$0xff] %vm412, %v371
  %416 = vst.msk [vmem:[%s2 + $0x18] sm:$0xff] %vm412, %v374
  %417 = vst.msk [vmem:[%s2 + $0x20] sm:$0xff] %vm412, %v377
  %418 = vst.msk [vmem:[%s2 + $0x28] sm:$0xff] %vm412, %v380
  %419 = vst.msk [vmem:[%s2 + $0x30] sm:$0xff] %vm412, %v383
  %420 = vst.msk [vmem:[%s2 + $0x38] sm:$0xff] %vm412, %v386
  %421 = vst.msk [vmem:[%s2 + $0x40] sm:$0xff] %vm412, %v389
  %422 = vst.msk [vmem:[%s2 + $0x48] sm:$0xff] %vm412, %v392
  %423 = vst.msk [vmem:[%s2 + $0x50] sm:$0xff] %vm412, %v395
  %424 = vst.msk [vmem:[%s2 + $0x58] sm:$0xff] %vm412, %v398
  %425 = vst.msk [vmem:[%s2 + $0x60] sm:$0xff] %vm412, %v401
  %426 = vst.msk [vmem:[%s2 + $0x68] sm:$0xff] %vm412, %v404
  %427 = vst.msk [vmem:[%s2 + $0x70] sm:$0xff] %vm412, %v407
  %428 = vst.msk [vmem:[%s2 + $0x78] sm:$0xff] %vm412, %v410
  // Predicated region
  $region10: #{tpu_custom_call.1} parent=0 // pred_check
    _
  $region11: #{tpu_custom_call.1} parent=0 // pred_check_branch
    %430 = sbr.rel (0) target = $region13
  $region12: #{tpu_custom_call.1} parent=0 // pred_region
    _
  $region13: #{tpu_custom_call.1} parent=0 // pred_fallthru
    _
  // Predicated region
  $region14: #{tpu_custom_call.1} parent=0 // pred_check
    _
  $region15: #{tpu_custom_call.1} parent=0 // pred_check_branch
    %432 = sbr.rel (0) target = $region17
  $region16: #{tpu_custom_call.1} parent=0 // pred_region
    _
  $region17: #{tpu_custom_call.1} parent=0 // pred_fallthru
    _

</llo_original>
